<compile_context>
chip_gen: v5e
topology: v5e:2x2
jax: 0.10.0
libtpu: 0.0.40
codegen_flags: <defaults>
</compile_context>

<pallas_src>
import functools

import jax
import jax.numpy as jnp
from jax import lax
from jax.experimental import pallas as pl
from jax.experimental.pallas import tpu as pltpu


_NEG_INF = -1e30
_LN_EPS = 1e-5   # torch.nn.LayerNorm default


# ---------------------------------------------------------------------------
# Fused transformer layer kernel (one grid step = one sequence in the batch)
# LN1 -> fused QKV matmul -> head-batched causal attention -> out proj -> residual
#     -> LN2 -> ReLU FFN -> residual
# ---------------------------------------------------------------------------

def _layer_kernel(x_ref, ln1g_ref, ln1b_ref, wqkv_ref, bqkv_ref, wo_ref, bo_ref,
                  ln2g_ref, ln2b_ref, w1_ref, b1_ref, w2_ref, b2_ref,
                  y_ref, *, n_heads):
    # Residual stream arrives in bf16 (halves per-layer HBM traffic); compute in f32.
    x = x_ref[0].astype(jnp.float32)                     # (T, D)
    t, d = x.shape
    hd = d // n_heads
    scale = 1.0 / (hd ** 0.5)

    # ---- LayerNorm 1 (f32 stats) ----
    mu = jnp.mean(x, axis=-1, keepdims=True)
    xc = x - mu
    var = jnp.mean(xc * xc, axis=-1, keepdims=True)
    hln = xc * lax.rsqrt(var + _LN_EPS) * ln1g_ref[...] + ln1b_ref[...]

    # ---- fused QKV projection: one well-shaped (T,D)x(D,3D) MXU pass ----
    qkv = jnp.dot(hln.astype(jnp.bfloat16), wqkv_ref[...],
                  preferred_element_type=jnp.float32) + bqkv_ref[...]     # (T, 3D) f32

    # ---- head-batched causal attention ----
    q3 = jnp.stack([qkv[:, h * hd:(h + 1) * hd] for h in range(n_heads)], axis=0) * scale
    k3 = jnp.stack([qkv[:, d + h * hd: d + (h + 1) * hd] for h in range(n_heads)], axis=0)
    v3 = jnp.stack([qkv[:, 2 * d + h * hd: 2 * d + (h + 1) * hd] for h in range(n_heads)],
                   axis=0)
    q3 = q3.astype(jnp.bfloat16)                          # (H, T, hd)
    k3 = k3.astype(jnp.bfloat16)
    v3 = v3.astype(jnp.bfloat16)

    row = lax.broadcasted_iota(jnp.int32, (t, t), 0)
    col = lax.broadcasted_iota(jnp.int32, (t, t), 1)
    causal = (col <= row)[None, :, :]                     # (1, T, T)

    s = jnp.einsum('hqd,hkd->hqk', q3, k3,
                   preferred_element_type=jnp.float32)    # (H, T, T) f32
    s = jnp.where(causal, s, _NEG_INF)
    m = jnp.max(s, axis=-1, keepdims=True)
    # f32 exp kept for v5e portability; on v6e/v7x a bf16 exp roughly doubles EUP rate.
    p = jnp.exp(s - m)
    l = jnp.sum(p, axis=-1, keepdims=True)                # (H, T, 1)
    o = jnp.einsum('hqk,hkd->hqd', p.astype(jnp.bfloat16), v3,
                   preferred_element_type=jnp.float32)    # (H, T, hd) f32
    # Deferred softmax normalization: scale the small (T, hd) output, not the (T, T) probs.
    o = o * pl.reciprocal(l, approx=True)
    attn = jnp.concatenate([o[h] for h in range(n_heads)], axis=-1)   # (T, D), lane-dense

    # ---- output projection + residual ----
    x = x + jnp.dot(attn.astype(jnp.bfloat16), wo_ref[...],
                    preferred_element_type=jnp.float32) + bo_ref[...]

    # ---- LayerNorm 2 + ReLU FFN + residual ----
    mu = jnp.mean(x, axis=-1, keepdims=True)
    xc = x - mu
    var = jnp.mean(xc * xc, axis=-1, keepdims=True)
    hln2 = xc * lax.rsqrt(var + _LN_EPS) * ln2g_ref[...] + ln2b_ref[...]
    h1 = jnp.dot(hln2.astype(jnp.bfloat16), w1_ref[...],
                 preferred_element_type=jnp.float32) + b1_ref[...]
    h1 = jnp.maximum(h1, 0.0)                             # OPT/Galactica uses ReLU
    y = x + jnp.dot(h1.astype(jnp.bfloat16), w2_ref[...],
                    preferred_element_type=jnp.float32) + b2_ref[...]
    y_ref[0] = y.astype(jnp.bfloat16)


def fused_layer(x, layer, *, n_heads):
    n, t, d = x.shape
    # Weights / biases are constant across the batch grid -> keep them resident in VMEM
    # (single allocation, no per-step double-buffered DMA).
    resident = pl.BlockSpec(memory_space=pltpu.MemorySpace.VMEM)
    return pl.pallas_call(
        functools.partial(_layer_kernel, n_heads=n_heads),
        out_shape=jax.ShapeDtypeStruct((n, t, d), jnp.bfloat16),
        grid_spec=pltpu.PrefetchScalarGridSpec(
            num_scalar_prefetch=0,
            grid=(n,),
            in_specs=[pl.BlockSpec((1, t, d), lambda i: (i, 0, 0))]   # activations (bf16)
                     + [resident] * 12,                               # ln/qkv/wo/ffn params
            out_specs=pl.BlockSpec((1, t, d), lambda i: (i, 0, 0)),
        ),
        compiler_params=pltpu.CompilerParams(
            dimension_semantics=("parallel",),
            # Above the 16/32 MiB scoped defaults; re-derive (and q-tile) for v7x's 64 MiB.
            vmem_limit_bytes=64 * 1024 * 1024,
        ),
    )(x, layer["ln1_g"], layer["ln1_b"], layer["wqkv"], layer["bqkv"],
      layer["wo"], layer["bo"], layer["ln2_g"], layer["ln2_b"],
      layer["w1"], layer["b1"], layer["w2"], layer["b2"])


# ---------------------------------------------------------------------------
# Fused final-LayerNorm + "Yes"-logit head with the mean over pos_yes folded in.
# Only the selected time step and the pos_yes vocab rows are ever used, so the
# full (N, T, V) logits / (D, V) LM-head weight are never materialized.
# ---------------------------------------------------------------------------

def _head_kernel(x_ref, g_ref, b_ref, w_ref, o_ref, *, inv_p):
    x = x_ref[...].astype(jnp.float32)                    # (N, D)
    mu = jnp.mean(x, axis=-1, keepdims=True)
    xc = x - mu
    var = jnp.mean(xc * xc, axis=-1, keepdims=True)
    h = xc * lax.rsqrt(var + _LN_EPS) * g_ref[...] + b_ref[...]
    # (N, D) x (P, D)^T contracted over D -> (N, P); tied LM head has no bias.
    logits = lax.dot_general(h.astype(jnp.bfloat16), w_ref[...],
                             (((1,), (1,)), ((), ())),
                             preferred_element_type=jnp.float32)
    # mean over the pos_yes logits, done in-kernel -> (N, 1)
    o_ref[...] = jnp.sum(logits, axis=-1, keepdims=True) * inv_p


def yes_head(x_sel, lnf_g, lnf_b, w_yes):
    n = x_sel.shape[0]
    p = w_yes.shape[0]
    vmem = pl.BlockSpec(memory_space=pltpu.MemorySpace.VMEM)
    return pl.pallas_call(
        functools.partial(_head_kernel, inv_p=1.0 / p),
        out_shape=jax.ShapeDtypeStruct((n, 1), jnp.float32),
        in_specs=[vmem, vmem, vmem, vmem],
        out_specs=vmem,
    )(x_sel, lnf_g, lnf_b, w_yes)


# ---------------------------------------------------------------------------
# Synthetic OPT-style decoder (galactica-125m architecture, toy size) + the
# Galactica.forward() output indexing.
# ---------------------------------------------------------------------------

def init_params(key, vocab, max_t, d_model, n_heads, d_ffn, n_layers):
    del n_heads
    scale = 0.02
    keys = jax.random.split(key, 2 + n_layers)
    params = {
        "embed": jax.random.normal(keys[0], (vocab, d_model), jnp.float32) * scale,
        # OPT learned positional embedding table (offset-2 convention)
        "pos_embed": jax.random.normal(keys[1], (max_t + 2, d_model), jnp.float32) * scale,
        "lnf_g": jnp.ones((1, d_model), jnp.float32),
        "lnf_b": jnp.zeros((1, d_model), jnp.float32),
        "layers": [],
    }
    for l in range(n_layers):
        lk = jax.random.split(keys[2 + l], 6)
        wq = jax.random.normal(lk[0], (d_model, d_model), jnp.float32) * scale
        wk = jax.random.normal(lk[1], (d_model, d_model), jnp.float32) * scale
        wv = jax.random.normal(lk[2], (d_model, d_model), jnp.float32) * scale
        params["layers"].append({
            "ln1_g": jnp.ones((1, d_model), jnp.float32),
            "ln1_b": jnp.zeros((1, d_model), jnp.float32),
            # fused QKV weight, stored in bf16 for the MXU (f32 accumulation in-kernel)
            "wqkv": jnp.concatenate([wq, wk, wv], axis=1).astype(jnp.bfloat16),
            "bqkv": jnp.zeros((1, 3 * d_model), jnp.float32),
            "wo": (jax.random.normal(lk[3], (d_model, d_model), jnp.float32) * scale
                   ).astype(jnp.bfloat16),
            "bo": jnp.zeros((1, d_model), jnp.float32),
            "ln2_g": jnp.ones((1, d_model), jnp.float32),
            "ln2_b": jnp.zeros((1, d_model), jnp.float32),
            "w1": (jax.random.normal(lk[4], (d_model, d_ffn), jnp.float32) * scale
                   ).astype(jnp.bfloat16),
            "b1": jnp.zeros((1, d_ffn), jnp.float32),
            "w2": (jax.random.normal(lk[5], (d_ffn, d_model), jnp.float32) * scale
                   ).astype(jnp.bfloat16),
            "b2": jnp.zeros((1, d_model), jnp.float32),
        })
    return params


@functools.partial(jax.jit, static_argnames=("n_heads",))
def galactica_forward(params, token_ids, lens, pos_yes, *, n_heads):
    """token_ids: (N, T) int32; lens: (N,) int32; pos_yes: (P,) int32 -> (N,) f32."""
    n, t = token_ids.shape

    # Embedding lookup + learned positional embeddings (gather glue, no Pallas form).
    x = jnp.take(params["embed"], token_ids, axis=0)                      # (N, T, D) f32
    x = x + params["pos_embed"][jnp.arange(t) + 2][None, :, :]            # OPT offset 2
    x = x.astype(jnp.bfloat16)                                            # bf16 residual stream

    for layer in params["layers"]:
        x = fused_layer(x, layer, n_heads=n_heads)                        # (N, T, D) bf16

    # out[:, lens, :][:, -1, pos_yes].mean(1)
    #   -> uses lens[-1] as the time index for EVERY row (exact PyTorch semantics,
    #      reproduced deliberately).  Only that time step and the pos_yes vocab rows
    #      are ever computed.
    x_sel = jnp.take(x, lens[-1], axis=1)                                 # (N, D) bf16
    w_yes = jnp.take(params["embed"], pos_yes, axis=0).astype(jnp.bfloat16)  # (P, D)
    preactivations = yes_head(x_sel, params["lnf_g"], params["lnf_b"], w_yes)[:, 0]  # (N,)
    return preactivations


# ---------------------------------------------------------------------------
# Demo
# ---------------------------------------------------------------------------

if __name__ == "__main__":
    N, T = 2, 8            # batch of compound/assay prompts, padded token length
    D, H, F = 32, 2, 64    # hidden size, heads, ffn size
    V, L = 128, 2          # vocab, layers
    P = 2                  # number of "Yes" token ids

    key = jax.random.PRNGKey(0)
    kp, kt, kl, ky = jax.random.split(key, 4)

    params = init_params(kp, V, T, D, H, F, L)
    token_ids = jax.random.randint(kt, (N, T), 1, V, dtype=jnp.int32)
    lens = jax.random.randint(kl, (N,), 1, T, dtype=jnp.int32)       # last-token index per row
    pos_yes = jax.random.randint(ky, (P,), 0, V, dtype=jnp.int32)    # tokenizer('Yes').input_ids

    preact = galactica_forward(params, token_ids, lens, pos_yes, n_heads=H)
    jax.block_until_ready(preact)
    assert preact.shape == (N,) and preact.dtype == jnp.float32
    print("KERNEL_OK")
</pallas_src>

<mosaic_0001>
module attributes {stable_mosaic.version = 11 : i64} {
  func.func @_layer_kernel(%arg0: i32, %arg1: memref<1x8x32xbf16, #tpu.memory_space<vmem>>, %arg2: memref<1x32xf32, #tpu.memory_space<vmem>>, %arg3: memref<1x32xf32, #tpu.memory_space<vmem>>, %arg4: memref<32x96xbf16, #tpu.memory_space<vmem>>, %arg5: memref<1x96xf32, #tpu.memory_space<vmem>>, %arg6: memref<32x32xbf16, #tpu.memory_space<vmem>>, %arg7: memref<1x32xf32, #tpu.memory_space<vmem>>, %arg8: memref<1x32xf32, #tpu.memory_space<vmem>>, %arg9: memref<1x32xf32, #tpu.memory_space<vmem>>, %arg10: memref<32x64xbf16, #tpu.memory_space<vmem>>, %arg11: memref<1x64xf32, #tpu.memory_space<vmem>>, %arg12: memref<64x32xbf16, #tpu.memory_space<vmem>>, %arg13: memref<1x32xf32, #tpu.memory_space<vmem>>, %arg14: memref<1x8x32xbf16, #tpu.memory_space<vmem>>) attributes {dimension_semantics = [#tpu.dimension_semantics<parallel>], iteration_bounds = array<i64: 2>, scalar_prefetch = 0 : i64, scratch_operands = 0 : i64, tpu.core_type = #tpu.core_type<tc>, window_params = [{transform_indices = @transform_0, window_bounds = array<i64: 1, 8, 32>}, {pipeline_mode = #tpu.pipeline_mode<synchronous>, transform_indices = @transform_1, window_bounds = array<i64: 1, 32>}, {pipeline_mode = #tpu.pipeline_mode<synchronous>, transform_indices = @transform_2, window_bounds = array<i64: 1, 32>}, {pipeline_mode = #tpu.pipeline_mode<synchronous>, transform_indices = @transform_3, window_bounds = array<i64: 32, 96>}, {pipeline_mode = #tpu.pipeline_mode<synchronous>, transform_indices = @transform_4, window_bounds = array<i64: 1, 96>}, {pipeline_mode = #tpu.pipeline_mode<synchronous>, transform_indices = @transform_5, window_bounds = array<i64: 32, 32>}, {pipeline_mode = #tpu.pipeline_mode<synchronous>, transform_indices = @transform_6, window_bounds = array<i64: 1, 32>}, {pipeline_mode = #tpu.pipeline_mode<synchronous>, transform_indices = @transform_7, window_bounds = array<i64: 1, 32>}, {pipeline_mode = #tpu.pipeline_mode<synchronous>, transform_indices = @transform_8, window_bounds = array<i64: 1, 32>}, {pipeline_mode = #tpu.pipeline_mode<synchronous>, transform_indices = @transform_9, window_bounds = array<i64: 32, 64>}, {pipeline_mode = #tpu.pipeline_mode<synchronous>, transform_indices = @transform_10, window_bounds = array<i64: 1, 64>}, {pipeline_mode = #tpu.pipeline_mode<synchronous>, transform_indices = @transform_11, window_bounds = array<i64: 64, 32>}, {pipeline_mode = #tpu.pipeline_mode<synchronous>, transform_indices = @transform_12, window_bounds = array<i64: 1, 32>}, {transform_indices = @transform_13, window_bounds = array<i64: 1, 8, 32>}]} {
    %c0 = arith.constant 0 : index
    %c0_0 = arith.constant 0 : index
    %c0_1 = arith.constant 0 : index
    %0 = vector.load %arg1[%c0, %c0_0, %c0_1] : memref<1x8x32xbf16, #tpu.memory_space<vmem>>, vector<1x8x32xbf16>
    %1 = vector.shape_cast %0 : vector<1x8x32xbf16> to vector<8x32xbf16>
    %2 = arith.extf %1 : vector<8x32xbf16> to vector<8x32xf32>
    %cst = arith.constant dense<0.000000e+00> : vector<8xf32>
    %3 = vector.multi_reduction <add>, %2, %cst [1] : vector<8x32xf32> to vector<8xf32>
    %4 = vector.shape_cast %3 : vector<8xf32> to vector<8x1xf32>
    %cst_2 = arith.constant 3.200000e+01 : f32
    %5 = vector.broadcast %cst_2 : f32 to vector<8x1xf32>
    %6 = arith.divf %4, %5 : vector<8x1xf32>
    %7 = vector.broadcast %6 : vector<8x1xf32> to vector<8x32xf32>
    %8 = arith.subf %2, %7 : vector<8x32xf32>
    %9 = arith.mulf %8, %8 : vector<8x32xf32>
    %cst_3 = arith.constant dense<0.000000e+00> : vector<8xf32>
    %10 = vector.multi_reduction <add>, %9, %cst_3 [1] : vector<8x32xf32> to vector<8xf32>
    %11 = vector.shape_cast %10 : vector<8xf32> to vector<8x1xf32>
    %cst_4 = arith.constant 3.200000e+01 : f32
    %12 = vector.broadcast %cst_4 : f32 to vector<8x1xf32>
    %13 = arith.divf %11, %12 : vector<8x1xf32>
    %cst_5 = arith.constant 9.99999974E-6 : f32
    %14 = vector.broadcast %cst_5 : f32 to vector<8x1xf32>
    %15 = arith.addf %13, %14 : vector<8x1xf32>
    %16 = math.rsqrt %15 : vector<8x1xf32>
    %17 = vector.broadcast %16 : vector<8x1xf32> to vector<8x32xf32>
    %18 = arith.mulf %8, %17 : vector<8x32xf32>
    %c0_6 = arith.constant 0 : index
    %c0_7 = arith.constant 0 : index
    %19 = vector.load %arg2[%c0_6, %c0_7] : memref<1x32xf32, #tpu.memory_space<vmem>>, vector<1x32xf32>
    %20 = vector.broadcast %19 : vector<1x32xf32> to vector<8x32xf32>
    %21 = arith.mulf %18, %20 : vector<8x32xf32>
    %c0_8 = arith.constant 0 : index
    %c0_9 = arith.constant 0 : index
    %22 = vector.load %arg3[%c0_8, %c0_9] : memref<1x32xf32, #tpu.memory_space<vmem>>, vector<1x32xf32>
    %23 = vector.broadcast %22 : vector<1x32xf32> to vector<8x32xf32>
    %24 = arith.addf %21, %23 : vector<8x32xf32>
    %25 = arith.truncf %24 : vector<8x32xf32> to vector<8x32xbf16>
    %c0_10 = arith.constant 0 : index
    %c0_11 = arith.constant 0 : index
    %26 = vector.load %arg4[%c0_10, %c0_11] : memref<32x96xbf16, #tpu.memory_space<vmem>>, vector<32x96xbf16>
    %cst_12 = arith.constant dense<0.000000e+00> : vector<8x96xf32>
    %27 = tpu.matmul %25, %26, %cst_12 {dimension_numbers = #tpu.dot_dimension_numbers<[1], [0], [0], [1], [0, 0, 1, 1], [], []>} : vector<8x32xbf16>, vector<32x96xbf16>, vector<8x96xf32> -> vector<8x96xf32>
    %c0_13 = arith.constant 0 : index
    %c0_14 = arith.constant 0 : index
    %28 = vector.load %arg5[%c0_13, %c0_14] : memref<1x96xf32, #tpu.memory_space<vmem>>, vector<1x96xf32>
    %29 = vector.broadcast %28 : vector<1x96xf32> to vector<8x96xf32>
    %30 = arith.addf %27, %29 : vector<8x96xf32>
    %31 = vector.extract_strided_slice %30 {offsets = [0, 0], sizes = [8, 16], strides = [1, 1]} : vector<8x96xf32> to vector<8x16xf32>
    %32 = vector.extract_strided_slice %30 {offsets = [0, 16], sizes = [8, 16], strides = [1, 1]} : vector<8x96xf32> to vector<8x16xf32>
    %33 = vector.shape_cast %31 : vector<8x16xf32> to vector<1x8x16xf32>
    %34 = vector.shape_cast %32 : vector<8x16xf32> to vector<1x8x16xf32>
    %35 = tpu.concatenate %33, %34 in 0 : vector<1x8x16xf32>, vector<1x8x16xf32> -> vector<2x8x16xf32>
    %cst_15 = arith.constant 2.500000e-01 : f32
    %36 = vector.broadcast %cst_15 : f32 to vector<2x8x16xf32>
    %37 = arith.mulf %35, %36 : vector<2x8x16xf32>
    %38 = vector.extract_strided_slice %30 {offsets = [0, 32], sizes = [8, 16], strides = [1, 1]} : vector<8x96xf32> to vector<8x16xf32>
    %39 = vector.extract_strided_slice %30 {offsets = [0, 48], sizes = [8, 16], strides = [1, 1]} : vector<8x96xf32> to vector<8x16xf32>
    %40 = vector.shape_cast %38 : vector<8x16xf32> to vector<1x8x16xf32>
    %41 = vector.shape_cast %39 : vector<8x16xf32> to vector<1x8x16xf32>
    %42 = tpu.concatenate %40, %41 in 0 : vector<1x8x16xf32>, vector<1x8x16xf32> -> vector<2x8x16xf32>
    %43 = vector.extract_strided_slice %30 {offsets = [0, 64], sizes = [8, 16], strides = [1, 1]} : vector<8x96xf32> to vector<8x16xf32>
    %44 = vector.extract_strided_slice %30 {offsets = [0, 80], sizes = [8, 16], strides = [1, 1]} : vector<8x96xf32> to vector<8x16xf32>
    %45 = vector.shape_cast %43 : vector<8x16xf32> to vector<1x8x16xf32>
    %46 = vector.shape_cast %44 : vector<8x16xf32> to vector<1x8x16xf32>
    %47 = tpu.concatenate %45, %46 in 0 : vector<1x8x16xf32>, vector<1x8x16xf32> -> vector<2x8x16xf32>
    %48 = arith.truncf %37 : vector<2x8x16xf32> to vector<2x8x16xbf16>
    %49 = arith.truncf %42 : vector<2x8x16xf32> to vector<2x8x16xbf16>
    %50 = arith.truncf %47 : vector<2x8x16xf32> to vector<2x8x16xbf16>
    %51 = tpu.iota {dimensions = array<i32: 0>} : vector<8x8xi32>
    %52 = tpu.iota {dimensions = array<i32: 1>} : vector<8x8xi32>
    %53 = arith.cmpi sle, %52, %51 : vector<8x8xi32>
    %54 = vector.shape_cast %53 : vector<8x8xi1> to vector<1x8x8xi1>
    "tpu.trace_start"() <{level = 10 : i32, message = "hqd,hkd->hqk"}> : () -> ()
    %cst_16 = arith.constant dense<0.000000e+00> : vector<2x8x8xf32>
    %55 = tpu.matmul %48, %49, %cst_16 {dimension_numbers = #tpu.dot_dimension_numbers<[2], [2], [1], [1], [0, 0, 0, 1, 1, 1], [0], [0]>} : vector<2x8x16xbf16>, vector<2x8x16xbf16>, vector<2x8x8xf32> -> vector<2x8x8xf32>
    %cst_17 = arith.constant -1.000000e+30 : f32
    "tpu.trace_stop"() : () -> ()
    %56 = vector.shape_cast %54 : vector<1x8x8xi1> to vector<1x8x8xi1>
    %57 = vector.broadcast %56 : vector<1x8x8xi1> to vector<2x8x8xi1>
    %58 = vector.broadcast %cst_17 : f32 to vector<2x8x8xf32>
    %59 = arith.select %57, %55, %58 : vector<2x8x8xi1>, vector<2x8x8xf32>
    %cst_18 = arith.constant dense<0xFF800000> : vector<2x8xf32>
    %60 = vector.multi_reduction <maximumf>, %59, %cst_18 [2] : vector<2x8x8xf32> to vector<2x8xf32>
    %61 = vector.shape_cast %60 : vector<2x8xf32> to vector<2x8x1xf32>
    %62 = vector.broadcast %61 : vector<2x8x1xf32> to vector<2x8x8xf32>
    %63 = arith.subf %59, %62 : vector<2x8x8xf32>
    %64 = math.exp %63 : vector<2x8x8xf32>
    %cst_19 = arith.constant dense<0.000000e+00> : vector<2x8xf32>
    %65 = vector.multi_reduction <add>, %64, %cst_19 [2] : vector<2x8x8xf32> to vector<2x8xf32>
    %66 = vector.shape_cast %65 : vector<2x8xf32> to vector<2x8x1xf32>
    %67 = arith.truncf %64 : vector<2x8x8xf32> to vector<2x8x8xbf16>
    "tpu.trace_start"() <{level = 10 : i32, message = "hqk,hkd->hqd"}> : () -> ()
    %cst_20 = arith.constant dense<0.000000e+00> : vector<2x8x16xf32>
    %68 = tpu.matmul %67, %50, %cst_20 {dimension_numbers = #tpu.dot_dimension_numbers<[2], [1], [1], [2], [0, 0, 0, 1, 1, 2], [0], [0]>} : vector<2x8x8xbf16>, vector<2x8x16xbf16>, vector<2x8x16xf32> -> vector<2x8x16xf32>
    "tpu.trace_stop"() : () -> ()
    %69 = tpu.reciprocal %66 {approx = true} : vector<2x8x1xf32> -> vector<2x8x1xf32>
    %70 = vector.broadcast %69 : vector<2x8x1xf32> to vector<2x8x16xf32>
    %71 = arith.mulf %68, %70 : vector<2x8x16xf32>
    %72 = vector.extract_strided_slice %71 {offsets = [0, 0, 0], sizes = [1, 8, 16], strides = [1, 1, 1]} : vector<2x8x16xf32> to vector<1x8x16xf32>
    %73 = vector.shape_cast %72 : vector<1x8x16xf32> to vector<8x16xf32>
    %74 = vector.extract_strided_slice %71 {offsets = [1, 0, 0], sizes = [1, 8, 16], strides = [1, 1, 1]} : vector<2x8x16xf32> to vector<1x8x16xf32>
    %75 = vector.shape_cast %74 : vector<1x8x16xf32> to vector<8x16xf32>
    %76 = tpu.concatenate %73, %75 in 1 : vector<8x16xf32>, vector<8x16xf32> -> vector<8x32xf32>
    %77 = arith.truncf %76 : vector<8x32xf32> to vector<8x32xbf16>
    %c0_21 = arith.constant 0 : index
    %c0_22 = arith.constant 0 : index
    %78 = vector.load %arg6[%c0_21, %c0_22] : memref<32x32xbf16, #tpu.memory_space<vmem>>, vector<32x32xbf16>
    %cst_23 = arith.constant dense<0.000000e+00> : vector<8x32xf32>
    %79 = tpu.matmul %77, %78, %cst_23 {dimension_numbers = #tpu.dot_dimension_numbers<[1], [0], [0], [1], [0, 0, 1, 1], [], []>} : vector<8x32xbf16>, vector<32x32xbf16>, vector<8x32xf32> -> vector<8x32xf32>
    %80 = arith.addf %2, %79 : vector<8x32xf32>
    %c0_24 = arith.constant 0 : index
    %c0_25 = arith.constant 0 : index
    %81 = vector.load %arg7[%c0_24, %c0_25] : memref<1x32xf32, #tpu.memory_space<vmem>>, vector<1x32xf32>
    %82 = vector.broadcast %81 : vector<1x32xf32> to vector<8x32xf32>
    %83 = arith.addf %80, %82 : vector<8x32xf32>
    %cst_26 = arith.constant dense<0.000000e+00> : vector<8xf32>
    %84 = vector.multi_reduction <add>, %83, %cst_26 [1] : vector<8x32xf32> to vector<8xf32>
    %85 = vector.shape_cast %84 : vector<8xf32> to vector<8x1xf32>
    %cst_27 = arith.constant 3.200000e+01 : f32
    %86 = vector.broadcast %cst_27 : f32 to vector<8x1xf32>
    %87 = arith.divf %85, %86 : vector<8x1xf32>
    %88 = vector.broadcast %87 : vector<8x1xf32> to vector<8x32xf32>
    %89 = arith.subf %83, %88 : vector<8x32xf32>
    %90 = arith.mulf %89, %89 : vector<8x32xf32>
    %cst_28 = arith.constant dense<0.000000e+00> : vector<8xf32>
    %91 = vector.multi_reduction <add>, %90, %cst_28 [1] : vector<8x32xf32> to vector<8xf32>
    %92 = vector.shape_cast %91 : vector<8xf32> to vector<8x1xf32>
    %cst_29 = arith.constant 3.200000e+01 : f32
    %93 = vector.broadcast %cst_29 : f32 to vector<8x1xf32>
    %94 = arith.divf %92, %93 : vector<8x1xf32>
    %cst_30 = arith.constant 9.99999974E-6 : f32
    %95 = vector.broadcast %cst_30 : f32 to vector<8x1xf32>
    %96 = arith.addf %94, %95 : vector<8x1xf32>
    %97 = math.rsqrt %96 : vector<8x1xf32>
    %98 = vector.broadcast %97 : vector<8x1xf32> to vector<8x32xf32>
    %99 = arith.mulf %89, %98 : vector<8x32xf32>
    %c0_31 = arith.constant 0 : index
    %c0_32 = arith.constant 0 : index
    %100 = vector.load %arg8[%c0_31, %c0_32] : memref<1x32xf32, #tpu.memory_space<vmem>>, vector<1x32xf32>
    %101 = vector.broadcast %100 : vector<1x32xf32> to vector<8x32xf32>
    %102 = arith.mulf %99, %101 : vector<8x32xf32>
    %c0_33 = arith.constant 0 : index
    %c0_34 = arith.constant 0 : index
    %103 = vector.load %arg9[%c0_33, %c0_34] : memref<1x32xf32, #tpu.memory_space<vmem>>, vector<1x32xf32>
    %104 = vector.broadcast %103 : vector<1x32xf32> to vector<8x32xf32>
    %105 = arith.addf %102, %104 : vector<8x32xf32>
    %106 = arith.truncf %105 : vector<8x32xf32> to vector<8x32xbf16>
    %c0_35 = arith.constant 0 : index
    %c0_36 = arith.constant 0 : index
    %107 = vector.load %arg10[%c0_35, %c0_36] : memref<32x64xbf16, #tpu.memory_space<vmem>>, vector<32x64xbf16>
    %cst_37 = arith.constant dense<0.000000e+00> : vector<8x64xf32>
    %108 = tpu.matmul %106, %107, %cst_37 {dimension_numbers = #tpu.dot_dimension_numbers<[1], [0], [0], [1], [0, 0, 1, 1], [], []>} : vector<8x32xbf16>, vector<32x64xbf16>, vector<8x64xf32> -> vector<8x64xf32>
    %c0_38 = arith.constant 0 : index
    %c0_39 = arith.constant 0 : index
    %109 = vector.load %arg11[%c0_38, %c0_39] : memref<1x64xf32, #tpu.memory_space<vmem>>, vector<1x64xf32>
    %110 = vector.broadcast %109 : vector<1x64xf32> to vector<8x64xf32>
    %111 = arith.addf %108, %110 : vector<8x64xf32>
    %cst_40 = arith.constant 0.000000e+00 : f32
    %112 = vector.broadcast %cst_40 : f32 to vector<8x64xf32>
    %113 = arith.maximumf %111, %112 : vector<8x64xf32>
    %114 = arith.truncf %113 : vector<8x64xf32> to vector<8x64xbf16>
    %c0_41 = arith.constant 0 : index
    %c0_42 = arith.constant 0 : index
    %115 = vector.load %arg12[%c0_41, %c0_42] : memref<64x32xbf16, #tpu.memory_space<vmem>>, vector<64x32xbf16>
    %cst_43 = arith.constant dense<0.000000e+00> : vector<8x32xf32>
    %116 = tpu.matmul %114, %115, %cst_43 {dimension_numbers = #tpu.dot_dimension_numbers<[1], [0], [0], [1], [0, 0, 1, 1], [], []>} : vector<8x64xbf16>, vector<64x32xbf16>, vector<8x32xf32> -> vector<8x32xf32>
    %117 = arith.addf %83, %116 : vector<8x32xf32>
    %c0_44 = arith.constant 0 : index
    %c0_45 = arith.constant 0 : index
    %118 = vector.load %arg13[%c0_44, %c0_45] : memref<1x32xf32, #tpu.memory_space<vmem>>, vector<1x32xf32>
    %119 = vector.broadcast %118 : vector<1x32xf32> to vector<8x32xf32>
    %120 = arith.addf %117, %119 : vector<8x32xf32>
    %121 = arith.truncf %120 : vector<8x32xf32> to vector<8x32xbf16>
    %c0_46 = arith.constant 0 : index
    %c0_47 = arith.constant 0 : index
    %c0_48 = arith.constant 0 : index
    %122 = vector.load %arg14[%c0_46, %c0_47, %c0_48] : memref<1x8x32xbf16, #tpu.memory_space<vmem>>, vector<1x8x32xbf16>
    %123 = vector.shape_cast %122 : vector<1x8x32xbf16> to vector<8x32xbf16>
    %124 = vector.shape_cast %121 : vector<8x32xbf16> to vector<1x8x32xbf16>
    tpu.vector_store %arg14[%c0_46, %c0_47, %c0_48], %124 {strides = array<i32>} : memref<1x8x32xbf16, #tpu.memory_space<vmem>>, vector<1x8x32xbf16>,
    return
  }
  func.func @transform_0(%arg0: i32) -> (i32, i32, i32) {
    %c0_i32 = arith.constant 0 : i32
    %c0_i32_0 = arith.constant 0 : i32
    %c0_i32_1 = arith.constant 0 : i32
    return %arg0, %c0_i32, %c0_i32_0 : i32, i32, i32
  }
  func.func @transform_1(%arg0: i32) -> (i32, i32) {
    %c0_i32 = arith.constant 0 : i32
    %c0_i32_0 = arith.constant 0 : i32
    %c0_i32_1 = arith.constant 0 : i32
    return %c0_i32, %c0_i32_0 : i32, i32
  }
  func.func @transform_2(%arg0: i32) -> (i32, i32) {
    %c0_i32 = arith.constant 0 : i32
    %c0_i32_0 = arith.constant 0 : i32
    %c0_i32_1 = arith.constant 0 : i32
    return %c0_i32, %c0_i32_0 : i32, i32
  }
  func.func @transform_3(%arg0: i32) -> (i32, i32) {
    %c0_i32 = arith.constant 0 : i32
    %c0_i32_0 = arith.constant 0 : i32
    %c0_i32_1 = arith.constant 0 : i32
    return %c0_i32, %c0_i32_0 : i32, i32
  }
  func.func @transform_4(%arg0: i32) -> (i32, i32) {
    %c0_i32 = arith.constant 0 : i32
    %c0_i32_0 = arith.constant 0 : i32
    %c0_i32_1 = arith.constant 0 : i32
    return %c0_i32, %c0_i32_0 : i32, i32
  }
  func.func @transform_5(%arg0: i32) -> (i32, i32) {
    %c0_i32 = arith.constant 0 : i32
    %c0_i32_0 = arith.constant 0 : i32
    %c0_i32_1 = arith.constant 0 : i32
    return %c0_i32, %c0_i32_0 : i32, i32
  }
  func.func @transform_6(%arg0: i32) -> (i32, i32) {
    %c0_i32 = arith.constant 0 : i32
    %c0_i32_0 = arith.constant 0 : i32
    %c0_i32_1 = arith.constant 0 : i32
    return %c0_i32, %c0_i32_0 : i32, i32
  }
  func.func @transform_7(%arg0: i32) -> (i32, i32) {
    %c0_i32 = arith.constant 0 : i32
    %c0_i32_0 = arith.constant 0 : i32
    %c0_i32_1 = arith.constant 0 : i32
    return %c0_i32, %c0_i32_0 : i32, i32
  }
  func.func @transform_8(%arg0: i32) -> (i32, i32) {
    %c0_i32 = arith.constant 0 : i32
    %c0_i32_0 = arith.constant 0 : i32
    %c0_i32_1 = arith.constant 0 : i32
    return %c0_i32, %c0_i32_0 : i32, i32
  }
  func.func @transform_9(%arg0: i32) -> (i32, i32) {
    %c0_i32 = arith.constant 0 : i32
    %c0_i32_0 = arith.constant 0 : i32
    %c0_i32_1 = arith.constant 0 : i32
    return %c0_i32, %c0_i32_0 : i32, i32
  }
  func.func @transform_10(%arg0: i32) -> (i32, i32) {
    %c0_i32 = arith.constant 0 : i32
    %c0_i32_0 = arith.constant 0 : i32
    %c0_i32_1 = arith.constant 0 : i32
    return %c0_i32, %c0_i32_0 : i32, i32
  }
  func.func @transform_11(%arg0: i32) -> (i32, i32) {
    %c0_i32 = arith.constant 0 : i32
    %c0_i32_0 = arith.constant 0 : i32
    %c0_i32_1 = arith.constant 0 : i32
    return %c0_i32, %c0_i32_0 : i32, i32
  }
  func.func @transform_12(%arg0: i32) -> (i32, i32) {
    %c0_i32 = arith.constant 0 : i32
    %c0_i32_0 = arith.constant 0 : i32
    %c0_i32_1 = arith.constant 0 : i32
    return %c0_i32, %c0_i32_0 : i32, i32
  }
  func.func @transform_13(%arg0: i32) -> (i32, i32, i32) {
    %c0_i32 = arith.constant 0 : i32
    %c0_i32_0 = arith.constant 0 : i32
    %c0_i32_1 = arith.constant 0 : i32
    return %arg0, %c0_i32, %c0_i32_0 : i32, i32, i32
  }
}

module attributes {stable_mosaic.version = 11 : i64} {
  func.func @_head_kernel(%arg0: memref<2x32xbf16, #tpu.memory_space<vmem>>, %arg1: memref<1x32xf32, #tpu.memory_space<vmem>>, %arg2: memref<1x32xf32, #tpu.memory_space<vmem>>, %arg3: memref<2x32xbf16, #tpu.memory_space<vmem>>, %arg4: memref<2x1xf32, #tpu.memory_space<vmem>>) attributes {dimension_semantics = [], scalar_prefetch = 0 : i64, scratch_operands = 0 : i64, tpu.core_type = #tpu.core_type<tc>} {
    %c0 = arith.constant 0 : index
    %c0_0 = arith.constant 0 : index
    %0 = vector.load %arg0[%c0, %c0_0] : memref<2x32xbf16, #tpu.memory_space<vmem>>, vector<2x32xbf16>
    %1 = arith.extf %0 : vector<2x32xbf16> to vector<2x32xf32>
    %cst = arith.constant dense<0.000000e+00> : vector<2xf32>
    %2 = vector.multi_reduction <add>, %1, %cst [1] : vector<2x32xf32> to vector<2xf32>
    %3 = vector.shape_cast %2 : vector<2xf32> to vector<2x1xf32>
    %cst_1 = arith.constant 3.200000e+01 : f32
    %4 = vector.broadcast %cst_1 : f32 to vector<2x1xf32>
    %5 = arith.divf %3, %4 : vector<2x1xf32>
    %6 = vector.broadcast %5 : vector<2x1xf32> to vector<2x32xf32>
    %7 = arith.subf %1, %6 : vector<2x32xf32>
    %8 = arith.mulf %7, %7 : vector<2x32xf32>
    %cst_2 = arith.constant dense<0.000000e+00> : vector<2xf32>
    %9 = vector.multi_reduction <add>, %8, %cst_2 [1] : vector<2x32xf32> to vector<2xf32>
    %10 = vector.shape_cast %9 : vector<2xf32> to vector<2x1xf32>
    %cst_3 = arith.constant 3.200000e+01 : f32
    %11 = vector.broadcast %cst_3 : f32 to vector<2x1xf32>
    %12 = arith.divf %10, %11 : vector<2x1xf32>
    %cst_4 = arith.constant 9.99999974E-6 : f32
    %13 = vector.broadcast %cst_4 : f32 to vector<2x1xf32>
    %14 = arith.addf %12, %13 : vector<2x1xf32>
    %15 = math.rsqrt %14 : vector<2x1xf32>
    %16 = vector.broadcast %15 : vector<2x1xf32> to vector<2x32xf32>
    %17 = arith.mulf %7, %16 : vector<2x32xf32>
    %c0_5 = arith.constant 0 : index
    %c0_6 = arith.constant 0 : index
    %18 = vector.load %arg1[%c0_5, %c0_6] : memref<1x32xf32, #tpu.memory_space<vmem>>, vector<1x32xf32>
    %19 = vector.broadcast %18 : vector<1x32xf32> to vector<2x32xf32>
    %20 = arith.mulf %17, %19 : vector<2x32xf32>
    %c0_7 = arith.constant 0 : index
    %c0_8 = arith.constant 0 : index
    %21 = vector.load %arg2[%c0_7, %c0_8] : memref<1x32xf32, #tpu.memory_space<vmem>>, vector<1x32xf32>
    %22 = vector.broadcast %21 : vector<1x32xf32> to vector<2x32xf32>
    %23 = arith.addf %20, %22 : vector<2x32xf32>
    %24 = arith.truncf %23 : vector<2x32xf32> to vector<2x32xbf16>
    %c0_9 = arith.constant 0 : index
    %c0_10 = arith.constant 0 : index
    %25 = vector.load %arg3[%c0_9, %c0_10] : memref<2x32xbf16, #tpu.memory_space<vmem>>, vector<2x32xbf16>
    %cst_11 = arith.constant dense<0.000000e+00> : vector<2x2xf32>
    %26 = tpu.matmul %24, %25, %cst_11 {dimension_numbers = #tpu.dot_dimension_numbers<[1], [1], [0], [0], [0, 0, 1, 0], [], []>} : vector<2x32xbf16>, vector<2x32xbf16>, vector<2x2xf32> -> vector<2x2xf32>
    %cst_12 = arith.constant dense<0.000000e+00> : vector<2xf32>
    %27 = vector.multi_reduction <add>, %26, %cst_12 [1] : vector<2x2xf32> to vector<2xf32>
    %28 = vector.shape_cast %27 : vector<2xf32> to vector<2x1xf32>
    %cst_13 = arith.constant 5.000000e-01 : f32
    %29 = vector.broadcast %cst_13 : f32 to vector<2x1xf32>
    %30 = arith.mulf %28, %29 : vector<2x1xf32>
    %c0_14 = arith.constant 0 : index
    %c0_15 = arith.constant 0 : index
    %31 = vector.load %arg4[%c0_14, %c0_15] : memref<2x1xf32, #tpu.memory_space<vmem>>, vector<2x1xf32>
    tpu.vector_store %arg4[%c0_14, %c0_15], %30 {strides = array<i32>} : memref<2x1xf32, #tpu.memory_space<vmem>>, vector<2x1xf32>,
    return
  }
}

</mosaic_0001>

<llo_original>
// kernel: galactica_forward.5
$region0: #{galactica_forward.5}
  #allocation0 [shape = 'u32[]', space=smem, size = 0x4, offset = 0x4, fixed_abs, tag = 'smem constant byte address 0x4 - core index']
  #allocation1 [shape = 'u32[72,128]{1,0:T(1,128)}', space=vmem, size = 0x9000, scoped, tag = 'internal scratch']
  %s0 = inlined_call_operand.vmem [shape: bf16[2,32], index: 0, kind: input, shape index: {}]
  %s1 = inlined_call_operand.vmem [shape: f32[1,32], index: 1, kind: input, shape index: {}]
  %s2 = inlined_call_operand.vmem [shape: f32[1,32], index: 2, kind: input, shape index: {}]
  %s3 = inlined_call_operand.vmem [shape: bf16[2,32], index: 3, kind: input, shape index: {}]
  %s4 = inlined_call_operand.vmem [shape: f32[2,1], index: 4, kind: output, shape index: {}]
  %s5 = sld [smem:[#allocation0]]
  $region26: #{galactica_forward.5} parent=0
    _
  %s7 = ssub.s32 1, %s5
  %s8 = scalar_select 0, %s7, %s5
  // Predicated region
  $region2: #{galactica_forward.5} parent=0 // pred_check
    _
  $region3: #{galactica_forward.5} parent=0 // pred_check_branch
    %10 = sbr.rel (0) target = $region5
  $region4: #{galactica_forward.5} parent=0 // pred_region
    _
  $region5: #{galactica_forward.5} parent=0 // pred_fallthru
    _
  // Predicated region
  $region6: #{galactica_forward.5} parent=0 // pred_check
    _
  $region7: #{galactica_forward.5} parent=0 // pred_check_branch
    %12 = sbr.rel (0) target = $region9
  $region8: #{galactica_forward.5} parent=0 // pred_region
    _
  $region9: #{galactica_forward.5} parent=0 // pred_fallthru
    _
  // Predicated region
  $region10: #{galactica_forward.5} parent=0 // pred_check
    _
  $region11: #{galactica_forward.5} parent=0 // pred_check_branch
    %14 = sbr.rel (0) target = $region13
  $region12: #{galactica_forward.5} parent=0 // pred_region
    _
  $region13: #{galactica_forward.5} parent=0 // pred_fallthru
    _
  // Predicated region
  $region14: #{galactica_forward.5} parent=0 // pred_check
    _
  $region15: #{galactica_forward.5} parent=0 // pred_check_branch
    %16 = sbr.rel (0) target = $region17
  $region16: #{galactica_forward.5} parent=0 // pred_region
    _
  $region17: #{galactica_forward.5} parent=0 // pred_fallthru
    _
  %v18 = vld [vmem:[%s0] sm:$0x1]
  %v19 = vunpack.c.l.bf16 %v18
  %vm20 = vcmask 254976
  %v21 = vsel %vm20, %v19, 0.0
  %22 = vadd.xlane.f32.xlu0 %v21
  %v23 = vpop.xlane.xlu0 %22
  %v24 = vrcp.pop 32.0
  %v25 = vmul.f32 32.0, %v24
  %v26 = vsub.f32 1.0, %v25
  %v27 = vmul.f32 %v24, %v26
  %v28 = vadd.f32 %v24, %v27
  %vm29 = vweird.f32 %v24
  %v30 = vsel %vm29, %v24, %v28
  %v31 = vmul.f32 %v23, %v30
  %v32 = vsub.f32 %v19, %v31
  %v33 = vmul.f32 %v32, %v32
  %v34 = vsel %vm20, %v33, 0.0
  %35 = vadd.xlane.f32.xlu0 %v34
  %v36 = vpop.xlane.xlu0 %35
  %v37 = vmul.f32 %v36, %v30
  %v38 = vadd.f32 %v37, 1e-05
  %v39 = vrsqrt.pop %v38
  %v40 = vmul.f32 %v39, %v38
  %v41 = vmul.f32 %v40, %v39
  %v42 = vmul.f32 0.5, %v41
  %v43 = vsub.f32 1.5, %v42
  %v44 = vmul.f32 %v39, %v43
  %vm45 = vweird.f32 %v38
  %vm46 = vweird.f32 %v39
  %vm47 = vmor %vm45, %vm46
  %v48 = vsel %vm47, %v39, %v44
  %v49 = vmul.f32 %v32, %v48
  %v50 = vld [vmem:[%s1] sm:$0x1]
  %v52 = vperm.slane %v50, 0
  %v54 = vmul.f32 %v49, %v52
  %v55 = vld [vmem:[%s2] sm:$0x1]
  %v57 = vperm.slane %v55, 0
  %v59 = vadd.f32 %v54, %v57
  %v60 = vpack.c.bf16 %v59, %v59
  %v61 = vld [vmem:[%s3] sm:$0x1]
  %vm62 = vcmask 261120
  %v64 = vsel %vm62, %v60, 0
  %v67 = vsel %vm62, %v61, 0
  %69 = vmatpush.bf16.xpose.msra.mxu0 0
  %70 = vmatpush.bf16.xpose.msra.mxu0 0
  %71 = vmatpush.bf16.xpose.msra.mxu0 0
  %72 = vmatpush.bf16.xpose.msra.mxu0 0
  %73 = vmatpush.bf16.xpose.msra.mxu0 0
  %74 = vmatpush.bf16.xpose.msra.mxu0 0
  %75 = vmatpush.bf16.xpose.msra.mxu0 0
  %76 = vmatpush.bf16.xpose.msra.mxu0 %v67
  %77 = vmatmul.bf16.gmra.mxu0 %v64
  %v78 = vpop.f32.mrf.mxu0
  %v79 = vadd.f32 0.0, %v78
  %v80 = vpop.f32.mrf.mxu0
  %81 = vdwg.mxu0
  %vm82 = vcmask 9216
  %v83 = vsel %vm82, %v79, 0.0
  %84 = vadd.xlane.f32.xlu0 %v83
  %v85 = vpop.xlane.xlu0 %84
  %v86 = vmul.f32 %v85, 0.5
  %vm87 = vcmask 1024
  %88 = vst.msk [vmem:[%s4] sm:$0x3] %vm87, %v86
  // Predicated region
  $region18: #{galactica_forward.5} parent=0 // pred_check
    _
  $region19: #{galactica_forward.5} parent=0 // pred_check_branch
    %90 = sbr.rel (0) target = $region21
  $region20: #{galactica_forward.5} parent=0 // pred_region
    _
  $region21: #{galactica_forward.5} parent=0 // pred_fallthru
    _
  // Predicated region
  $region22: #{galactica_forward.5} parent=0 // pred_check
    _
  $region23: #{galactica_forward.5} parent=0 // pred_check_branch
    %92 = sbr.rel (0) target = $region25
  $region24: #{galactica_forward.5} parent=0 // pred_region
    _
  $region25: #{galactica_forward.5} parent=0 // pred_fallthru
    _

// kernel: galactica_forward.3
$region0: #{galactica_forward.3}
  #allocation0 [shape = 'u32[]', space=smem, size = 0x4, offset = 0x4, fixed_abs, tag = 'smem constant byte address 0x4 - core index']
  #allocation1 [shape = 'u32[72,128]{1,0:T(1,128)}', space=vmem, size = 0x9000, scoped, tag = 'internal scratch']
  %s0 = inlined_call_operand.vmem [shape: bf16[2,8,32], index: 0, kind: input, shape index: {}]
  %s1 = inlined_call_operand.vmem [shape: f32[1,32], index: 1, kind: input, shape index: {}]
  %s2 = inlined_call_operand.vmem [shape: f32[1,32], index: 2, kind: input, shape index: {}]
  %s3 = inlined_call_operand.vmem [shape: bf16[32,96], index: 3, kind: input, shape index: {}]
  %s4 = inlined_call_operand.vmem [shape: f32[1,96], index: 4, kind: input, shape index: {}]
  %s5 = inlined_call_operand.vmem [shape: bf16[32,32], index: 5, kind: input, shape index: {}]
  %s6 = inlined_call_operand.vmem [shape: f32[1,32], index: 6, kind: input, shape index: {}]
  %s7 = inlined_call_operand.vmem [shape: f32[1,32], index: 7, kind: input, shape index: {}]
  %s8 = inlined_call_operand.vmem [shape: f32[1,32], index: 8, kind: input, shape index: {}]
  %s9 = inlined_call_operand.vmem [shape: bf16[32,64], index: 9, kind: input, shape index: {}]
  %s10 = inlined_call_operand.vmem [shape: f32[1,64], index: 10, kind: input, shape index: {}]
  %s11 = inlined_call_operand.vmem [shape: bf16[64,32], index: 11, kind: input, shape index: {}]
  %s12 = inlined_call_operand.vmem [shape: f32[1,32], index: 12, kind: input, shape index: {}]
  %s13 = inlined_call_operand.vmem [shape: bf16[2,8,32], index: 13, kind: output, shape index: {}]
  %s14 = sld [smem:[#allocation0]]
  $region85: #{galactica_forward.3} parent=0
    _
  %s16 = ssub.s32 1, %s14
  %s17 = scalar_select 0, %s16, %s14
  loop: start=0, step=1, limit=4
  $region2: #{galactica_forward.3} parent=0 // loop_pre_header
    _
  $region3: #{galactica_forward.3} parent=0 // loop_header
    %s19 = sphi 0, %s23
    %p20 = scmp.ge.s32.totalorder %s19, 4
    %s29 = sphi 0, %s31
    %s32 = sphi 0, %s29
    %s33 = sphi 0, %s32
    %s49 = sphi 0, %s33
    %s53 = sphi 0, %s53
    %s55 = sphi 0, %s53
    %s56 = sphi 0, %s55
    %s70 = sphi 0, %s56
    %s74 = sphi 0, %s74
    %s76 = sphi 0, %s74
    %s77 = sphi 0, %s76
    %s91 = sphi 0, %s77
    %s95 = sphi 0, %s95
    %s97 = sphi 0, %s95
    %s98 = sphi 0, %s97
    %s112 = sphi 0, %s98
    %s116 = sphi 0, %s116
    %s118 = sphi 0, %s116
    %s119 = sphi 0, %s118
    %s133 = sphi 0, %s119
    %s137 = sphi 0, %s137
    %s139 = sphi 0, %s137
    %s140 = sphi 0, %s139
    %s154 = sphi 0, %s140
    %s158 = sphi 0, %s158
    %s160 = sphi 0, %s158
    %s161 = sphi 0, %s160
    %s175 = sphi 0, %s161
    %s179 = sphi 0, %s179
    %s181 = sphi 0, %s179
    %s182 = sphi 0, %s181
    %s196 = sphi 0, %s182
    %s200 = sphi 0, %s200
    %s202 = sphi 0, %s200
    %s203 = sphi 0, %s202
    %s217 = sphi 0, %s203
    %s221 = sphi 0, %s221
    %s223 = sphi 0, %s221
    %s224 = sphi 0, %s223
    %s238 = sphi 0, %s224
    %s242 = sphi 0, %s242
    %s244 = sphi 0, %s242
    %s245 = sphi 0, %s244
    %s259 = sphi 0, %s245
    %s263 = sphi 0, %s263
    %s265 = sphi 0, %s263
    %s266 = sphi 0, %s265
    %s280 = sphi 0, %s266
    %s284 = sphi 0, %s284
    %s286 = sphi 0, %s284
    %s287 = sphi 0, %s286
    %s301 = sphi 0, %s287
    %s307 = sphi 0, %s309
    %s310 = sphi 0, %s307
    %s311 = sphi 0, %s310
    %s327 = sphi 0, %s311
  $region4: #{galactica_forward.3} parent=0 // loop_header_branch
    %22 = sbr.rel (%p20) target = $region8
  $region5: #{galactica_forward.3} parent=0 // loop_body
    %s24 = ssub.s32 %s19, 1
    %s25 = ssub.s32 %s19, 2
    %s26 = sadd.s32 %s19, 1
    %s27 = ssub.s32 %s19, %s26
    %p28 = scmp.eq.s32.totalorder %s27, 0
    %s30 = sadd.s32 %s29, 1
    %s31 = scalar_select %p28, %s29, %s30
    %p34 = pneg %p28
    %p35 = scmp.eq.s32.totalorder %s19, 1
    %p36 = por %p34, %p35
    %p37 = scmp.ne.s32.totalorder %s29, %s32
    %p38 = scmp.eq.s32.totalorder %s19, 0
    %p39 = por %p37, %p38
    %p40 = scmp.ne.s32.totalorder %s29, %s32
    %p41 = scmp.eq.s32.totalorder %s24, 1
    %p42 = por %p40, %p41
    %p43 = scmp.ne.s32.totalorder %s32, %s33
    %p44 = scmp.eq.s32.totalorder %s24, 0
    %p45 = por %p43, %p44
    %p46 = scmp.ne.s32.totalorder %s32, %s33
    %p47 = scmp.eq.s32.totalorder %s25, 1
    %p48 = por %p46, %p47
    %p50 = scmp.ne.s32.totalorder %s33, %s49
    %p51 = scmp.eq.s32.totalorder %s25, 0
    %p52 = por %p50, %p51
    %s54 = sadd.s32 %s53, 1
    %p57 = scmp.eq.s32.totalorder %s19, 1
    %p58 = scmp.ne.s32.totalorder %s53, %s55
    %p59 = scmp.eq.s32.totalorder %s19, 0
    %p60 = por %p58, %p59
    %p61 = scmp.ne.s32.totalorder %s53, %s55
    %p62 = scmp.eq.s32.totalorder %s24, 1
    %p63 = por %p61, %p62
    %p64 = scmp.ne.s32.totalorder %s55, %s56
    %p65 = scmp.eq.s32.totalorder %s24, 0
    %p66 = por %p64, %p65
    %p67 = scmp.ne.s32.totalorder %s55, %s56
    %p68 = scmp.eq.s32.totalorder %s25, 1
    %p69 = por %p67, %p68
    %p71 = scmp.ne.s32.totalorder %s56, %s70
    %p72 = scmp.eq.s32.totalorder %s25, 0
    %p73 = por %p71, %p72
    %s75 = sadd.s32 %s74, 1
    %p78 = scmp.eq.s32.totalorder %s19, 1
    %p79 = scmp.ne.s32.totalorder %s74, %s76
    %p80 = scmp.eq.s32.totalorder %s19, 0
    %p81 = por %p79, %p80
    %p82 = scmp.ne.s32.totalorder %s74, %s76
    %p83 = scmp.eq.s32.totalorder %s24, 1
    %p84 = por %p82, %p83
    %p85 = scmp.ne.s32.totalorder %s76, %s77
    %p86 = scmp.eq.s32.totalorder %s24, 0
    %p87 = por %p85, %p86
    %p88 = scmp.ne.s32.totalorder %s76, %s77
    %p89 = scmp.eq.s32.totalorder %s25, 1
    %p90 = por %p88, %p89
    %p92 = scmp.ne.s32.totalorder %s77, %s91
    %p93 = scmp.eq.s32.totalorder %s25, 0
    %p94 = por %p92, %p93
    %s96 = sadd.s32 %s95, 1
    %p99 = scmp.eq.s32.totalorder %s19, 1
    %p100 = scmp.ne.s32.totalorder %s95, %s97
    %p101 = scmp.eq.s32.totalorder %s19, 0
    %p102 = por %p100, %p101
    %p103 = scmp.ne.s32.totalorder %s95, %s97
    %p104 = scmp.eq.s32.totalorder %s24, 1
    %p105 = por %p103, %p104
    %p106 = scmp.ne.s32.totalorder %s97, %s98
    %p107 = scmp.eq.s32.totalorder %s24, 0
    %p108 = por %p106, %p107
    %p109 = scmp.ne.s32.totalorder %s97, %s98
    %p110 = scmp.eq.s32.totalorder %s25, 1
    %p111 = por %p109, %p110
    %p113 = scmp.ne.s32.totalorder %s98, %s112
    %p114 = scmp.eq.s32.totalorder %s25, 0
    %p115 = por %p113, %p114
    %s117 = sadd.s32 %s116, 1
    %p120 = scmp.eq.s32.totalorder %s19, 1
    %p121 = scmp.ne.s32.totalorder %s116, %s118
    %p122 = scmp.eq.s32.totalorder %s19, 0
    %p123 = por %p121, %p122
    %p124 = scmp.ne.s32.totalorder %s116, %s118
    %p125 = scmp.eq.s32.totalorder %s24, 1
    %p126 = por %p124, %p125
    %p127 = scmp.ne.s32.totalorder %s118, %s119
    %p128 = scmp.eq.s32.totalorder %s24, 0
    %p129 = por %p127, %p128
    %p130 = scmp.ne.s32.totalorder %s118, %s119
    %p131 = scmp.eq.s32.totalorder %s25, 1
    %p132 = por %p130, %p131
    %p134 = scmp.ne.s32.totalorder %s119, %s133
    %p135 = scmp.eq.s32.totalorder %s25, 0
    %p136 = por %p134, %p135
    %s138 = sadd.s32 %s137, 1
    %p141 = scmp.eq.s32.totalorder %s19, 1
    %p142 = scmp.ne.s32.totalorder %s137, %s139
    %p143 = scmp.eq.s32.totalorder %s19, 0
    %p144 = por %p142, %p143
    %p145 = scmp.ne.s32.totalorder %s137, %s139
    %p146 = scmp.eq.s32.totalorder %s24, 1
    %p147 = por %p145, %p146
    %p148 = scmp.ne.s32.totalorder %s139, %s140
    %p149 = scmp.eq.s32.totalorder %s24, 0
    %p150 = por %p148, %p149
    %p151 = scmp.ne.s32.totalorder %s139, %s140
    %p152 = scmp.eq.s32.totalorder %s25, 1
    %p153 = por %p151, %p152
    %p155 = scmp.ne.s32.totalorder %s140, %s154
    %p156 = scmp.eq.s32.totalorder %s25, 0
    %p157 = por %p155, %p156
    %s159 = sadd.s32 %s158, 1
    %p162 = scmp.eq.s32.totalorder %s19, 1
    %p163 = scmp.ne.s32.totalorder %s158, %s160
    %p164 = scmp.eq.s32.totalorder %s19, 0
    %p165 = por %p163, %p164
    %p166 = scmp.ne.s32.totalorder %s158, %s160
    %p167 = scmp.eq.s32.totalorder %s24, 1
    %p168 = por %p166, %p167
    %p169 = scmp.ne.s32.totalorder %s160, %s161
    %p170 = scmp.eq.s32.totalorder %s24, 0
    %p171 = por %p169, %p170
    %p172 = scmp.ne.s32.totalorder %s160, %s161
    %p173 = scmp.eq.s32.totalorder %s25, 1
    %p174 = por %p172, %p173
    %p176 = scmp.ne.s32.totalorder %s161, %s175
    %p177 = scmp.eq.s32.totalorder %s25, 0
    %p178 = por %p176, %p177
    %s180 = sadd.s32 %s179, 1
    %p183 = scmp.eq.s32.totalorder %s19, 1
    %p184 = scmp.ne.s32.totalorder %s179, %s181
    %p185 = scmp.eq.s32.totalorder %s19, 0
    %p186 = por %p184, %p185
    %p187 = scmp.ne.s32.totalorder %s179, %s181
    %p188 = scmp.eq.s32.totalorder %s24, 1
    %p189 = por %p187, %p188
    %p190 = scmp.ne.s32.totalorder %s181, %s182
    %p191 = scmp.eq.s32.totalorder %s24, 0
    %p192 = por %p190, %p191
    %p193 = scmp.ne.s32.totalorder %s181, %s182
    %p194 = scmp.eq.s32.totalorder %s25, 1
    %p195 = por %p193, %p194
    %p197 = scmp.ne.s32.totalorder %s182, %s196
    %p198 = scmp.eq.s32.totalorder %s25, 0
    %p199 = por %p197, %p198
    %s201 = sadd.s32 %s200, 1
    %p204 = scmp.eq.s32.totalorder %s19, 1
    %p205 = scmp.ne.s32.totalorder %s200, %s202
    %p206 = scmp.eq.s32.totalorder %s19, 0
    %p207 = por %p205, %p206
    %p208 = scmp.ne.s32.totalorder %s200, %s202
    %p209 = scmp.eq.s32.totalorder %s24, 1
    %p210 = por %p208, %p209
    %p211 = scmp.ne.s32.totalorder %s202, %s203
    %p212 = scmp.eq.s32.totalorder %s24, 0
    %p213 = por %p211, %p212
    %p214 = scmp.ne.s32.totalorder %s202, %s203
    %p215 = scmp.eq.s32.totalorder %s25, 1
    %p216 = por %p214, %p215
    %p218 = scmp.ne.s32.totalorder %s203, %s217
    %p219 = scmp.eq.s32.totalorder %s25, 0
    %p220 = por %p218, %p219
    %s222 = sadd.s32 %s221, 1
    %p225 = scmp.eq.s32.totalorder %s19, 1
    %p226 = scmp.ne.s32.totalorder %s221, %s223
    %p227 = scmp.eq.s32.totalorder %s19, 0
    %p228 = por %p226, %p227
    %p229 = scmp.ne.s32.totalorder %s221, %s223
    %p230 = scmp.eq.s32.totalorder %s24, 1
    %p231 = por %p229, %p230
    %p232 = scmp.ne.s32.totalorder %s223, %s224
    %p233 = scmp.eq.s32.totalorder %s24, 0
    %p234 = por %p232, %p233
    %p235 = scmp.ne.s32.totalorder %s223, %s224
    %p236 = scmp.eq.s32.totalorder %s25, 1
    %p237 = por %p235, %p236
    %p239 = scmp.ne.s32.totalorder %s224, %s238
    %p240 = scmp.eq.s32.totalorder %s25, 0
    %p241 = por %p239, %p240
    %s243 = sadd.s32 %s242, 1
    %p246 = scmp.eq.s32.totalorder %s19, 1
    %p247 = scmp.ne.s32.totalorder %s242, %s244
    %p248 = scmp.eq.s32.totalorder %s19, 0
    %p249 = por %p247, %p248
    %p250 = scmp.ne.s32.totalorder %s242, %s244
    %p251 = scmp.eq.s32.totalorder %s24, 1
    %p252 = por %p250, %p251
    %p253 = scmp.ne.s32.totalorder %s244, %s245
    %p254 = scmp.eq.s32.totalorder %s24, 0
    %p255 = por %p253, %p254
    %p256 = scmp.ne.s32.totalorder %s244, %s245
    %p257 = scmp.eq.s32.totalorder %s25, 1
    %p258 = por %p256, %p257
    %p260 = scmp.ne.s32.totalorder %s245, %s259
    %p261 = scmp.eq.s32.totalorder %s25, 0
    %p262 = por %p260, %p261
    %s264 = sadd.s32 %s263, 1
    %p267 = scmp.eq.s32.totalorder %s19, 1
    %p268 = scmp.ne.s32.totalorder %s263, %s265
    %p269 = scmp.eq.s32.totalorder %s19, 0
    %p270 = por %p268, %p269
    %p271 = scmp.ne.s32.totalorder %s263, %s265
    %p272 = scmp.eq.s32.totalorder %s24, 1
    %p273 = por %p271, %p272
    %p274 = scmp.ne.s32.totalorder %s265, %s266
    %p275 = scmp.eq.s32.totalorder %s24, 0
    %p276 = por %p274, %p275
    %p277 = scmp.ne.s32.totalorder %s265, %s266
    %p278 = scmp.eq.s32.totalorder %s25, 1
    %p279 = por %p277, %p278
    %p281 = scmp.ne.s32.totalorder %s266, %s280
    %p282 = scmp.eq.s32.totalorder %s25, 0
    %p283 = por %p281, %p282
    %s285 = sadd.s32 %s284, 1
    %p288 = scmp.eq.s32.totalorder %s19, 1
    %p289 = scmp.ne.s32.totalorder %s284, %s286
    %p290 = scmp.eq.s32.totalorder %s19, 0
    %p291 = por %p289, %p290
    %p292 = scmp.ne.s32.totalorder %s284, %s286
    %p293 = scmp.eq.s32.totalorder %s24, 1
    %p294 = por %p292, %p293
    %p295 = scmp.ne.s32.totalorder %s286, %s287
    %p296 = scmp.eq.s32.totalorder %s24, 0
    %p297 = por %p295, %p296
    %p298 = scmp.ne.s32.totalorder %s286, %s287
    %p299 = scmp.eq.s32.totalorder %s25, 1
    %p300 = por %p298, %p299
    %p302 = scmp.ne.s32.totalorder %s287, %s301
    %p303 = scmp.eq.s32.totalorder %s25, 0
    %p304 = por %p302, %p303
    %s305 = ssub.s32 %s19, %s26
    %p306 = scmp.eq.s32.totalorder %s305, 0
    %s308 = sadd.s32 %s307, 1
    %s309 = scalar_select %p306, %s307, %s308
    %p312 = pneg %p306
    %p313 = scmp.eq.s32.totalorder %s19, 1
    %p314 = por %p312, %p313
    %p315 = scmp.ne.s32.totalorder %s307, %s310
    %p316 = scmp.eq.s32.totalorder %s19, 0
    %p317 = por %p315, %p316
    %p318 = scmp.ne.s32.totalorder %s307, %s310
    %p319 = scmp.eq.s32.totalorder %s24, 1
    %p320 = por %p318, %p319
    %p321 = scmp.ne.s32.totalorder %s310, %s311
    %p322 = scmp.eq.s32.totalorder %s24, 0
    %p323 = por %p321, %p322
    %p324 = scmp.ne.s32.totalorder %s310, %s311
    %p325 = scmp.eq.s32.totalorder %s25, 1
    %p326 = por %p324, %p325
    %p328 = scmp.ne.s32.totalorder %s311, %s327
    %p329 = scmp.eq.s32.totalorder %s25, 0
    %p330 = por %p328, %p329
    %p331 = scmp.le.s32.totalorder 1, %s19
    %p332 = scmp.lt.s32.totalorder %s19, 3
    %p333 = pnand %p331, %p332
    %p334 = pneg %p333
    // Predicated region
    $region9: #{galactica_forward.3} parent=5 // pred_check
      _
    $region10: #{galactica_forward.3} parent=5 // pred_check_branch
      %336 = sbr.rel (%p333) target = $region12
    $region11: #{galactica_forward.3} parent=5 // pred_region
      %s337 = ssub.s32 %s19, 1
      // Predicated region
      $region13: #{galactica_forward.3} parent=11 // pred_check
        %p338 = pneg %p66
      $region14: #{galactica_forward.3} parent=11 // pred_check_branch
        %340 = sbr.rel (%p338) target = $region16
      $region15: #{galactica_forward.3} parent=11 // pred_region
        _
      $region16: #{galactica_forward.3} parent=11 // pred_fallthru
        _
      // Predicated region
      $region17: #{galactica_forward.3} parent=11 // pred_check
        %p341 = pneg %p87
      $region18: #{galactica_forward.3} parent=11 // pred_check_branch
        %343 = sbr.rel (%p341) target = $region20
      $region19: #{galactica_forward.3} parent=11 // pred_region
        _
      $region20: #{galactica_forward.3} parent=11 // pred_fallthru
        _
      // Predicated region
      $region21: #{galactica_forward.3} parent=11 // pred_check
        %p344 = pneg %p108
      $region22: #{galactica_forward.3} parent=11 // pred_check_branch
        %346 = sbr.rel (%p344) target = $region24
      $region23: #{galactica_forward.3} parent=11 // pred_region
        _
      $region24: #{galactica_forward.3} parent=11 // pred_fallthru
        _
      // Predicated region
      $region25: #{galactica_forward.3} parent=11 // pred_check
        %p347 = pneg %p129
      $region26: #{galactica_forward.3} parent=11 // pred_check_branch
        %349 = sbr.rel (%p347) target = $region28
      $region27: #{galactica_forward.3} parent=11 // pred_region
        _
      $region28: #{galactica_forward.3} parent=11 // pred_fallthru
        _
      // Predicated region
      $region29: #{galactica_forward.3} parent=11 // pred_check
        %p350 = pneg %p150
      $region30: #{galactica_forward.3} parent=11 // pred_check_branch
        %352 = sbr.rel (%p350) target = $region32
      $region31: #{galactica_forward.3} parent=11 // pred_region
        _
      $region32: #{galactica_forward.3} parent=11 // pred_fallthru
        _
      // Predicated region
      $region33: #{galactica_forward.3} parent=11 // pred_check
        %p353 = pneg %p171
      $region34: #{galactica_forward.3} parent=11 // pred_check_branch
        %355 = sbr.rel (%p353) target = $region36
      $region35: #{galactica_forward.3} parent=11 // pred_region
        _
      $region36: #{galactica_forward.3} parent=11 // pred_fallthru
        _
      // Predicated region
      $region37: #{galactica_forward.3} parent=11 // pred_check
        %p356 = pneg %p192
      $region38: #{galactica_forward.3} parent=11 // pred_check_branch
        %358 = sbr.rel (%p356) target = $region40
      $region39: #{galactica_forward.3} parent=11 // pred_region
        _
      $region40: #{galactica_forward.3} parent=11 // pred_fallthru
        _
      // Predicated region
      $region41: #{galactica_forward.3} parent=11 // pred_check
        %p359 = pneg %p213
      $region42: #{galactica_forward.3} parent=11 // pred_check_branch
        %361 = sbr.rel (%p359) target = $region44
      $region43: #{galactica_forward.3} parent=11 // pred_region
        _
      $region44: #{galactica_forward.3} parent=11 // pred_fallthru
        _
      // Predicated region
      $region45: #{galactica_forward.3} parent=11 // pred_check
        %p362 = pneg %p234
      $region46: #{galactica_forward.3} parent=11 // pred_check_branch
        %364 = sbr.rel (%p362) target = $region48
      $region47: #{galactica_forward.3} parent=11 // pred_region
        _
      $region48: #{galactica_forward.3} parent=11 // pred_fallthru
        _
      // Predicated region
      $region49: #{galactica_forward.3} parent=11 // pred_check
        %p365 = pneg %p255
      $region50: #{galactica_forward.3} parent=11 // pred_check_branch
        %367 = sbr.rel (%p365) target = $region52
      $region51: #{galactica_forward.3} parent=11 // pred_region
        _
      $region52: #{galactica_forward.3} parent=11 // pred_fallthru
        _
      // Predicated region
      $region53: #{galactica_forward.3} parent=11 // pred_check
        %p368 = pneg %p276
      $region54: #{galactica_forward.3} parent=11 // pred_check_branch
        %370 = sbr.rel (%p368) target = $region56
      $region55: #{galactica_forward.3} parent=11 // pred_region
        _
      $region56: #{galactica_forward.3} parent=11 // pred_fallthru
        _
      // Predicated region
      $region57: #{galactica_forward.3} parent=11 // pred_check
        %p371 = pneg %p297
      $region58: #{galactica_forward.3} parent=11 // pred_check_branch
        %373 = sbr.rel (%p371) target = $region60
      $region59: #{galactica_forward.3} parent=11 // pred_region
        _
      $region60: #{galactica_forward.3} parent=11 // pred_fallthru
        _
    $region12: #{galactica_forward.3} parent=5 // pred_fallthru
      _
    %p374 = scmp.lt.s32.totalorder %s19, 2
    // Predicated region
    $region61: #{galactica_forward.3} parent=5 // pred_check
      %p375 = pneg %p374
    $region62: #{galactica_forward.3} parent=5 // pred_check_branch
      %377 = sbr.rel (%p375) target = $region64
    $region63: #{galactica_forward.3} parent=5 // pred_region
      // Predicated region
      $region65: #{galactica_forward.3} parent=63 // pred_check
        %p378 = pneg %p39
      $region66: #{galactica_forward.3} parent=63 // pred_check_branch
        %380 = sbr.rel (%p378) target = $region68
      $region67: #{galactica_forward.3} parent=63 // pred_region
        %p381 = scmp.lt.s32.totalorder %s19, 1
        %s382 = scalar_select %p381, %s19, 1
        %s383 = smul.addr %s382, 4
        %s384 = scalar_lea.vmem %s0, %s383
      $region68: #{galactica_forward.3} parent=63 // pred_fallthru
        _
    $region64: #{galactica_forward.3} parent=5 // pred_fallthru
      _
    %p385 = scmp.le.s32.totalorder 1, %s19
    %p386 = scmp.lt.s32.totalorder %s19, 3
    %p387 = pnand %p385, %p386
    %p388 = pneg %p387
    // Predicated region
    $region69: #{galactica_forward.3} parent=5 // pred_check
      _
    $region70: #{galactica_forward.3} parent=5 // pred_check_branch
      %390 = sbr.rel (%p387) target = $region72
    $region71: #{galactica_forward.3} parent=5 // pred_region
      %s391 = ssub.s32 %s19, 1
      %p392 = scmp.lt.s32.totalorder %s24, 1
      %s393 = scalar_select %p392, %s24, 1
      %s394 = smul.addr %s393, 4
      %s395 = scalar_lea.vmem %s0, %s394
      %p396 = pneg %p45
      %p397 = pneg %p42
      %p398 = pneg %p66
      %p399 = pneg %p63
      %p400 = pneg %p87
      %p401 = pneg %p84
      %p402 = pneg %p108
      %p403 = pneg %p105
      %p404 = pneg %p129
      %p405 = pneg %p126
      %p406 = pneg %p150
      %p407 = pneg %p147
      %p408 = pneg %p171
      %p409 = pneg %p168
      %p410 = pneg %p192
      %p411 = pneg %p189
      %p412 = pneg %p213
      %p413 = pneg %p210
      %p414 = pneg %p234
      %p415 = pneg %p231
      %p416 = pneg %p255
      %p417 = pneg %p252
      %p418 = pneg %p276
      %p419 = pneg %p273
      %p420 = pneg %p297
      %p421 = pneg %p294
      %p422 = pneg %p323
      %p423 = pneg %p320
      %p424 = scmp.lt.s32.totalorder %s24, 1
      %s425 = scalar_select %p424, %s24, 1
      %s426 = smul.addr %s425, 4
      %s427 = scalar_lea.vmem %s13, %s426
      %p428 = scmp.lt.s32.totalorder %s24, 1
      %s429 = scalar_select %p428, %s24, 1
      %s430 = smul.addr %s429, 4
      %s431 = scalar_lea.vmem %s0, %s430
      %p432 = scmp.lt.s32.totalorder %s24, 1
      %s433 = scalar_select %p432, %s24, 1
      %s434 = smul.addr %s433, 4
      %s435 = scalar_lea.vmem %s13, %s434
      %v437 = vld [vmem:[%s431] sm:$0xf]
      %v438 = vunpack.c.l.bf16 %v437
      %vm439 = vcmask 261120
      %v440 = vsel %vm439, %v438, 0.0
      %441 = vadd.xlane.f32.xlu0 %v440
      %v442 = vpop.xlane.xlu0 %441
      %v443 = vrcp.pop 32.0
      %v444 = vmul.f32 32.0, %v443
      %v445 = vsub.f32 1.0, %v444
      %v446 = vmul.f32 %v443, %v445
      %v447 = vadd.f32 %v443, %v446
      %vm448 = vweird.f32 %v443
      %v449 = vsel %vm448, %v443, %v447
      %v450 = vmul.f32 %v442, %v449
      %v451 = vsub.f32 %v438, %v450
      %v452 = vmul.f32 %v451, %v451
      %v453 = vsel %vm439, %v452, 0.0
      %454 = vadd.xlane.f32.xlu0 %v453
      %v455 = vpop.xlane.xlu0 %454
      %v456 = vmul.f32 %v455, %v449
      %v457 = vadd.f32 %v456, 1e-05
      %v458 = vrsqrt.pop %v457
      %v459 = vmul.f32 %v458, %v457
      %v460 = vmul.f32 %v459, %v458
      %v461 = vmul.f32 0.5, %v460
      %v462 = vsub.f32 1.5, %v461
      %v463 = vmul.f32 %v458, %v462
      %vm464 = vweird.f32 %v457
      %vm465 = vweird.f32 %v458
      %vm466 = vmor %vm464, %vm465
      %v467 = vsel %vm466, %v458, %v463
      %v468 = vmul.f32 %v451, %v467
      %v469 = vld [vmem:[%s1] sm:$0x1]
      %v471 = vperm.slane %v469, 0
      %v473 = vmul.f32 %v468, %v471
      %v474 = vld [vmem:[%s2] sm:$0x1]
      %v476 = vperm.slane %v474, 0
      %v478 = vadd.f32 %v473, %v476
      %v479 = vpack.c.bf16 %v478, %v478
      %v480 = vld [vmem:[%s3] sm:$0xf]
      %v481 = vld [vmem:[%s3 + $0x4] sm:$0xf]
      %v482 = vld [vmem:[%s3 + $0x8] sm:$0xf]
      %v483 = vld [vmem:[%s3 + $0xc] sm:$0xf]
      %v484 = vld [vmem:[%s4] sm:$0x1]
      %v486 = vperm.slane %v484, 0
      %v492 = vunpack.c.l.b16 %v480
      %v493 = vunpack.c.l.b16 %v481
      %v494 = vunpack.c.l.b16 %v482
      %v495 = vunpack.c.l.b16 %v483
      %v496 = vpack.c.b16 %v493, %v492
      %v497 = vpack.c.b16 %v495, %v494
      %v501 = vsel %vm439, %v479, 0
      %503 = vmatpush.bf16.msra.mxu0 0
      %504 = vmatpush.bf16.msra.mxu0 0
      %505 = vmatpush.bf16.msra.mxu0 0
      %506 = vmatpush.bf16.msra.mxu0 0
      %507 = vmatpush.bf16.msra.mxu0 0
      %508 = vmatpush.bf16.msra.mxu0 0
      %509 = vmatpush.bf16.msra.mxu0 %v497
      %510 = vmatpush.bf16.msra.mxu0 %v496
      %511 = vmatmul.bf16.gmra.mxu0 %v501
      %v512 = vpop.f32.mrf.mxu0
      %v513 = vadd.f32 %v486, %v512
      %v514 = vpop.f32.mrf.mxu0
      %515 = vdwg.mxu0
      %517 = vrot.lane.b32.xlu0 %v513, 112
      %v518 = vpop.permute.xlu0 %517
      %v520 = vmul.f32 %v513, 0.25
      %v521 = vmul.f32 %v518, 0.25
      %v522 = vpack.c.bf16 %v520, %v520
      %v523 = vpack.c.bf16 %v521, %v521
      %v524 = vpack.c.bf16 %v513, %v513
      %v525 = vpack.c.bf16 %v518, %v518
      %v526 = vlaneseq
      %v527 = vshrl.u32 %v526, 7
      %v528 = vlaneseq
      %v529 = vand.u32 %v528, 127
      %vm530 = vcmp.le.s32.totalorder %v529, %v527
      %v532 = vunpack.c.l.b16 %v524
      %v533 = vpack.c.b16 %v532, %v532
      %534 = vrot.lane.b32.xlu0 %v533, 96
      %v535 = vpop.permute.xlu0 %534
      %vm536 = vcmask 130048
      %v538 = vsel %vm536, %v522, 0
      %v541 = vsel %vm536, %v535, 0
      %543 = vmatpush.bf16.xpose.msra.mxu0 0
      %544 = vmatpush.bf16.xpose.msra.mxu0 0
      %545 = vmatpush.bf16.xpose.msra.mxu0 0
      %546 = vmatpush.bf16.xpose.msra.mxu0 0
      %547 = vmatpush.bf16.xpose.msra.mxu0 0
      %548 = vmatpush.bf16.xpose.msra.mxu0 0
      %549 = vmatpush.bf16.xpose.msra.mxu0 0
      %550 = vmatpush.bf16.xpose.msra.mxu0 %v541
      %551 = vmatmul.bf16.gmra.mxu0 %v538
      %v552 = vpop.f32.mrf.mxu0
      %v553 = vadd.f32 0.0, %v552
      %v554 = vpop.f32.mrf.mxu0
      %555 = vdwg.mxu0
      %v557 = vunpack.c.l.b16 %v525
      %v558 = vpack.c.b16 %v557, %v557
      %559 = vrot.lane.b32.xlu0 %v558, 96
      %v560 = vpop.permute.xlu0 %559
      %v562 = vsel %vm536, %v523, 0
      %v565 = vsel %vm536, %v560, 0
      %567 = vmatpush.bf16.xpose.msra.mxu0 0
      %568 = vmatpush.bf16.xpose.msra.mxu0 0
      %569 = vmatpush.bf16.xpose.msra.mxu0 0
      %570 = vmatpush.bf16.xpose.msra.mxu0 0
      %571 = vmatpush.bf16.xpose.msra.mxu0 0
      %572 = vmatpush.bf16.xpose.msra.mxu0 0
      %573 = vmatpush.bf16.xpose.msra.mxu0 0
      %574 = vmatpush.bf16.xpose.msra.mxu0 %v565
      %575 = vmatmul.bf16.gmra.mxu0 %v562
      %v576 = vpop.f32.mrf.mxu0
      %v577 = vadd.f32 0.0, %v576
      %v578 = vpop.f32.mrf.mxu0
      %579 = vdwg.mxu0
      %v580 = vsel %vm530, 1, 0
      %vm581 = vcmp.eq.s32.totalorder %v580, 1
      %v582 = vsel %vm581, %v553, -1e+30
      %v583 = vsel %vm581, %v577, -1e+30
      %vm584 = vcmask 64512
      %v585 = vsel %vm584, %v582, -inf
      %586 = vmax.xlane.f32.xlu0 %v585
      %v587 = vpop.xlane.xlu0 %586
      %v588 = vsel %vm584, %v583, -inf
      %589 = vmax.xlane.f32.xlu0 %v588
      %v590 = vpop.xlane.xlu0 %589
      %v591 = vsub.f32 %v582, %v587
      %v592 = vsub.f32 %v583, %v590
      %v593 = vmul.f32 %v591, 1.442695
      %v594 = vpow.pop %v593
      %v595 = vmul.f32 %v592, 1.442695
      %v596 = vpow.pop %v595
      %v597 = vsel %vm584, %v594, 0.0
      %598 = vadd.xlane.f32.xlu0 %v597
      %v599 = vpop.xlane.xlu0 %598
      %v600 = vsel %vm584, %v596, 0.0
      %601 = vadd.xlane.f32.xlu0 %v600
      %v602 = vpop.xlane.xlu0 %601
      %v603 = vpack.c.bf16 %v594, %v594
      %v604 = vpack.c.bf16 %v596, %v596
      %605 = vrot.lane.b32.xlu0 %v533, 64
      %v606 = vpop.permute.xlu0 %605
      %v608 = vsel %vm584, %v603, 0
      %vm610 = vcmask 1043456
      %v612 = vsel %vm610, %v606, 0
      %614 = vmatpush.bf16.msra.mxu0 0
      %615 = vmatpush.bf16.msra.mxu0 0
      %616 = vmatpush.bf16.msra.mxu0 0
      %617 = vmatpush.bf16.msra.mxu0 0
      %618 = vmatpush.bf16.msra.mxu0 0
      %619 = vmatpush.bf16.msra.mxu0 0
      %620 = vmatpush.bf16.msra.mxu0 0
      %621 = vmatpush.bf16.msra.mxu0 %v612
      %622 = vmatmul.bf16.gmra.mxu0 %v608
      %v623 = vpop.f32.mrf.mxu0
      %v624 = vadd.f32 0.0, %v623
      %v625 = vpop.f32.mrf.mxu0
      %626 = vdwg.mxu0
      %627 = vrot.lane.b32.xlu0 %v558, 64
      %v628 = vpop.permute.xlu0 %627
      %v630 = vsel %vm584, %v604, 0
      %v633 = vsel %vm610, %v628, 0
      %635 = vmatpush.bf16.msra.mxu0 0
      %636 = vmatpush.bf16.msra.mxu0 0
      %637 = vmatpush.bf16.msra.mxu0 0
      %638 = vmatpush.bf16.msra.mxu0 0
      %639 = vmatpush.bf16.msra.mxu0 0
      %640 = vmatpush.bf16.msra.mxu0 0
      %641 = vmatpush.bf16.msra.mxu0 0
      %642 = vmatpush.bf16.msra.mxu0 %v633
      %643 = vmatmul.bf16.gmra.mxu0 %v630
      %v644 = vpop.f32.mrf.mxu0
      %v645 = vadd.f32 0.0, %v644
      %v646 = vpop.f32.mrf.mxu0
      %647 = vdwg.mxu0
      %v648 = vrcp.pop %v599
      %v649 = vrcp.pop %v602
      %v650 = vmul.f32 %v624, %v648
      %v651 = vmul.f32 %v645, %v649
      %653 = vrot.lane.b32.xlu0 %v651, 16
      %v654 = vpop.permute.xlu0 %653
      %v656 = vsel %vm536, %v650, %v654
      %v657 = vpack.c.bf16 %v656, %v656
      %v658 = vld [vmem:[%s5] sm:$0xf]
      %v659 = vld [vmem:[%s5 + $0x4] sm:$0xf]
      %v660 = vld [vmem:[%s5 + $0x8] sm:$0xf]
      %v661 = vld [vmem:[%s5 + $0xc] sm:$0xf]
      %v666 = vunpack.c.l.b16 %v658
      %v667 = vunpack.c.l.b16 %v659
      %v668 = vunpack.c.l.b16 %v660
      %v669 = vunpack.c.l.b16 %v661
      %v670 = vpack.c.b16 %v667, %v666
      %v671 = vpack.c.b16 %v669, %v668
      %v675 = vsel %vm439, %v657, 0
      %677 = vmatpush.bf16.msra.mxu0 0
      %678 = vmatpush.bf16.msra.mxu0 0
      %679 = vmatpush.bf16.msra.mxu0 0
      %680 = vmatpush.bf16.msra.mxu0 0
      %681 = vmatpush.bf16.msra.mxu0 0
      %682 = vmatpush.bf16.msra.mxu0 0
      %683 = vmatpush.bf16.msra.mxu0 %v671
      %684 = vmatpush.bf16.msra.mxu0 %v670
      %685 = vmatmul.bf16.gmra.mxu0 %v675
      %v686 = vpop.f32.mrf.mxu0
      %v687 = vadd.f32 0.0, %v686
      %v688 = vpop.f32.mrf.mxu0
      %689 = vdwg.mxu0
      %v690 = vadd.f32 %v438, %v687
      %v691 = vld [vmem:[%s6] sm:$0x1]
      %v693 = vperm.slane %v691, 0
      %v695 = vadd.f32 %v690, %v693
      %v696 = vsel %vm439, %v695, 0.0
      %697 = vadd.xlane.f32.xlu0 %v696
      %v698 = vpop.xlane.xlu0 %697
      %v699 = vmul.f32 %v698, %v449
      %v700 = vsub.f32 %v695, %v699
      %v701 = vmul.f32 %v700, %v700
      %v702 = vsel %vm439, %v701, 0.0
      %703 = vadd.xlane.f32.xlu0 %v702
      %v704 = vpop.xlane.xlu0 %703
      %v705 = vmul.f32 %v704, %v449
      %v706 = vadd.f32 %v705, 1e-05
      %v707 = vrsqrt.pop %v706
      %v708 = vmul.f32 %v707, %v706
      %v709 = vmul.f32 %v708, %v707
      %v710 = vmul.f32 0.5, %v709
      %v711 = vsub.f32 1.5, %v710
      %v712 = vmul.f32 %v707, %v711
      %vm713 = vweird.f32 %v706
      %vm714 = vweird.f32 %v707
      %vm715 = vmor %vm713, %vm714
      %v716 = vsel %vm715, %v707, %v712
      %v717 = vmul.f32 %v700, %v716
      %v718 = vld [vmem:[%s7] sm:$0x1]
      %v720 = vperm.slane %v718, 0
      %v722 = vmul.f32 %v717, %v720
      %v723 = vld [vmem:[%s8] sm:$0x1]
      %v725 = vperm.slane %v723, 0
      %v727 = vadd.f32 %v722, %v725
      %v728 = vpack.c.bf16 %v727, %v727
      %v729 = vld [vmem:[%s9] sm:$0xf]
      %v730 = vld [vmem:[%s9 + $0x4] sm:$0xf]
      %v731 = vld [vmem:[%s9 + $0x8] sm:$0xf]
      %v732 = vld [vmem:[%s9 + $0xc] sm:$0xf]
      %v733 = vld [vmem:[%s10] sm:$0x1]
      %v735 = vperm.slane %v733, 0
      %v741 = vunpack.c.l.b16 %v729
      %v742 = vunpack.c.l.b16 %v730
      %v743 = vunpack.c.l.b16 %v731
      %v744 = vunpack.c.l.b16 %v732
      %v745 = vpack.c.b16 %v742, %v741
      %v746 = vpack.c.b16 %v744, %v743
      %v750 = vsel %vm439, %v728, 0
      %752 = vmatpush.bf16.msra.mxu0 0
      %753 = vmatpush.bf16.msra.mxu0 0
      %754 = vmatpush.bf16.msra.mxu0 0
      %755 = vmatpush.bf16.msra.mxu0 0
      %756 = vmatpush.bf16.msra.mxu0 0
      %757 = vmatpush.bf16.msra.mxu0 0
      %758 = vmatpush.bf16.msra.mxu0 %v746
      %759 = vmatpush.bf16.msra.mxu0 %v745
      %760 = vmatmul.bf16.gmra.mxu0 %v750
      %v761 = vpop.f32.mrf.mxu0
      %v762 = vadd.f32 %v735, %v761
      %v763 = vpop.f32.mrf.mxu0
      %764 = vdwg.mxu0
      %v765 = vmax.f32 %v762, 0.0
      %v766 = vpack.c.bf16 %v765, %v765
      %v767 = vld [vmem:[%s11] sm:$0xf]
      %v768 = vld [vmem:[%s11 + $0x4] sm:$0xf]
      %v769 = vld [vmem:[%s11 + $0x8] sm:$0xf]
      %v770 = vld [vmem:[%s11 + $0xc] sm:$0xf]
      %v771 = vld [vmem:[%s11 + $0x10] sm:$0xf]
      %v772 = vld [vmem:[%s11 + $0x14] sm:$0xf]
      %v773 = vld [vmem:[%s11 + $0x18] sm:$0xf]
      %v774 = vld [vmem:[%s11 + $0x1c] sm:$0xf]
      %v783 = vunpack.c.l.b16 %v767
      %v784 = vunpack.c.l.b16 %v768
      %v785 = vunpack.c.l.b16 %v769
      %v786 = vunpack.c.l.b16 %v770
      %v787 = vunpack.c.l.b16 %v771
      %v788 = vunpack.c.l.b16 %v772
      %v789 = vunpack.c.l.b16 %v773
      %v790 = vunpack.c.l.b16 %v774
      %v791 = vpack.c.b16 %v784, %v783
      %v792 = vpack.c.b16 %v786, %v785
      %v793 = vpack.c.b16 %v788, %v787
      %v794 = vpack.c.b16 %v790, %v789
      %vm799 = vcmask 523264
      %v801 = vsel %vm799, %v766, 0
      %803 = vmatpush.bf16.msra.mxu0 0
      %804 = vmatpush.bf16.msra.mxu0 0
      %805 = vmatpush.bf16.msra.mxu0 0
      %806 = vmatpush.bf16.msra.mxu0 0
      %807 = vmatpush.bf16.msra.mxu0 %v794
      %808 = vmatpush.bf16.msra.mxu0 %v793
      %809 = vmatpush.bf16.msra.mxu0 %v792
      %810 = vmatpush.bf16.msra.mxu0 %v791
      %811 = vmatmul.bf16.gmra.mxu0 %v801
      %v812 = vpop.f32.mrf.mxu0
      %v813 = vadd.f32 0.0, %v812
      %v814 = vpop.f32.mrf.mxu0
      %815 = vdwg.mxu0
      %v816 = vadd.f32 %v695, %v813
      %v817 = vld [vmem:[%s12] sm:$0x1]
      %v819 = vperm.slane %v817, 0
      %v821 = vadd.f32 %v816, %v819
      %v822 = vpack.c.bf16 %v821, %v821
      %vm823 = vcmask 257024
      %824 = vst.msk [vmem:[%s435] sm:$0xf] %vm823, %v822
      %p825 = scmp.lt.s32.totalorder %s24, 1
      %s826 = scalar_select %p825, %s24, 1
      %s827 = smul.addr %s826, 4
      %s828 = scalar_lea.vmem %s13, %s827
      // Predicated region
      $region73: #{galactica_forward.3} parent=71 // pred_check
        %p829 = pneg %p320
      $region74: #{galactica_forward.3} parent=71 // pred_check_branch
        %831 = sbr.rel (%p829) target = $region76
      $region75: #{galactica_forward.3} parent=71 // pred_region
        _
      $region76: #{galactica_forward.3} parent=71 // pred_fallthru
        _
    $region72: #{galactica_forward.3} parent=5 // pred_fallthru
      _
    %p832 = scmp.le.s32.totalorder 2, %s19
    // Predicated region
    $region77: #{galactica_forward.3} parent=5 // pred_check
      %p833 = pneg %p832
    $region78: #{galactica_forward.3} parent=5 // pred_check_branch
      %835 = sbr.rel (%p833) target = $region80
    $region79: #{galactica_forward.3} parent=5 // pred_region
      %s836 = ssub.s32 %s19, 2
      // Predicated region
      $region81: #{galactica_forward.3} parent=79 // pred_check
        %p837 = pneg %p326
      $region82: #{galactica_forward.3} parent=79 // pred_check_branch
        %839 = sbr.rel (%p837) target = $region84
      $region83: #{galactica_forward.3} parent=79 // pred_region
        %p840 = scmp.lt.s32.totalorder %s25, 1
        %s841 = scalar_select %p840, %s25, 1
        %s842 = smul.addr %s841, 4
        %s843 = scalar_lea.vmem %s13, %s842
      $region84: #{galactica_forward.3} parent=79 // pred_fallthru
        _
    $region80: #{galactica_forward.3} parent=5 // pred_fallthru
      _
  $region6: #{galactica_forward.3} parent=0 // loop_footer
    %s23 = sadd.s32 1, %s19
  $region7: #{galactica_forward.3} parent=0 // loop_footer_branch
    %18 = sbr.rel target = $region3
  $region8: #{galactica_forward.3} parent=0 // loop_exit
    _

</llo_original>
